<compile_context>
chip_gen: v7x
topology: tpu7x:2x2x1
jax: 0.10.0
libtpu: 0.0.40
codegen_flags: <defaults>
</compile_context>

<pallas_src>
import jax
import jax.numpy as jnp
from jax import lax
from jax.experimental import pallas as pl
from jax.experimental.pallas import tpu as pltpu


_VMEM_LIMIT_BYTES = 32 * 1024 * 1024   # safe scoped VMEM limit on v5e/v6e/v7x
_VMEM_TILE_BUDGET = 20 * 1024 * 1024   # headroom under the limit for tiles


def _ce_rowloss_kernel(logits_ref, labels_ref, loss_ref):
    """Per-row cross-entropy loss for one (TM, C) tile of logits."""
    logits = logits_ref[...].astype(jnp.float32)      # (TM, C) f32 working copy
    labels = labels_ref[...]                          # (TM, 1) int32
    tm, c = logits.shape

    # Numerically stable LSE: compute `shifted` once, reuse for both terms.
    m = jnp.max(logits, axis=-1, keepdims=True)       # (TM, 1)
    shifted = logits - m                               # (TM, C)

    # Vectorized target gather via broadcasted-iota one-hot mask.
    col_ids = lax.broadcasted_iota(jnp.int32, (tm, c), 1)          # (TM, C)
    onehot = col_ids == labels                                     # broadcast on lanes
    picked_shifted = jnp.sum(jnp.where(onehot, shifted, 0.0),
                             axis=-1, keepdims=True)               # (TM, 1)

    lse_shifted = jnp.log(jnp.sum(jnp.exp(shifted), axis=-1, keepdims=True))
    # per-row loss = (m + lse_shifted) - (m + picked_shifted)
    loss_ref[...] = lse_shifted - picked_shifted                    # (TM, 1)


def _pick_row_tile(n: int, c: int, in_bytes: int) -> int:
    """Largest row tile (multiple of 8) whose double-buffered working set fits VMEM."""
    # Per row: 2x pipelined input buffers (2*c*in_bytes) + ~2 live f32 (TM, C)
    # temps inside the kernel (~8*c bytes).
    per_row_bytes = c * (2 * in_bytes + 8)
    tm = _VMEM_TILE_BUDGET // max(per_row_bytes, 1)
    tm = max(8, min(int(tm), 1024))
    tm = (tm // 8) * 8
    n_pad = ((n + 7) // 8) * 8          # don't tile wider than the batch itself
    return min(tm, n_pad)


def cross_entropy_loss(pred_outputs: jax.Array, true_outputs: jax.Array) -> jax.Array:
    """Mean cross-entropy over rows; matches torch.nn.functional.cross_entropy."""
    assert true_outputs.ndim == 1, "Targets must be 1D tensor"
    n, c = pred_outputs.shape
    labels_2d = true_outputs.astype(jnp.int32).reshape(n, 1)

    in_bytes = jnp.dtype(pred_outputs.dtype).itemsize
    tm = _pick_row_tile(n, c, in_bytes)
    grid = (pl.cdiv(n, tm),)

    cost = pl.CostEstimate(
        flops=5 * n * c,
        transcendentals=n * c + n,
        bytes_accessed=n * c * in_bytes + n * 4 + n * 4,
    )

    per_row = pl.pallas_call(
        _ce_rowloss_kernel,
        out_shape=jax.ShapeDtypeStruct((n, 1), jnp.float32),
        grid=grid,
        in_specs=[
            pl.BlockSpec((tm, c), lambda i: (i, 0)),   # logits tile
            pl.BlockSpec((tm, 1), lambda i: (i, 0)),   # labels tile
        ],
        out_specs=pl.BlockSpec((tm, 1), lambda i: (i, 0)),
        compiler_params=pltpu.CompilerParams(
            dimension_semantics=("parallel",),
            vmem_limit_bytes=_VMEM_LIMIT_BYTES,
        ),
        cost_estimate=cost,
    )(pred_outputs, labels_2d)

    # Overhanging rows of the last block are never written (writes past the
    # array extent are dropped), so `per_row` holds exactly N valid losses.
    return jnp.sum(per_row) / jnp.float32(n)


if __name__ == "__main__":
    key = jax.random.PRNGKey(0)
    k_logits, k_labels = jax.random.split(key)

    N, C = 8, 32
    logits = jax.random.normal(k_logits, (N, C), dtype=jnp.float32)
    labels = jax.random.randint(k_labels, (N,), 0, C, dtype=jnp.int32)

    loss = cross_entropy_loss(logits, labels)
    jax.block_until_ready(loss)

    # sanity check against a pure-JAX reference
    ref = jnp.mean(
        jax.nn.logsumexp(logits, axis=-1) - logits[jnp.arange(N), labels]
    )
    assert jnp.allclose(loss, ref, atol=1e-5, rtol=1e-5), (loss, ref)

    print("KERNEL_OK")
</pallas_src>

<mosaic_0001>
module attributes {stable_mosaic.version = 11 : i64} {
  func.func @_ce_rowloss_kernel(%arg0: i32, %arg1: memref<8x32xf32, #tpu.memory_space<vmem>>, %arg2: memref<8x1xi32, #tpu.memory_space<vmem>>, %arg3: memref<8x1xf32, #tpu.memory_space<vmem>>) attributes {dimension_semantics = [#tpu.dimension_semantics<parallel>], iteration_bounds = array<i64: 1>, scalar_prefetch = 0 : i64, scratch_operands = 0 : i64, tpu.core_type = #tpu.core_type<tc>, window_params = [{transform_indices = @transform_0, window_bounds = array<i64: 8, 32>}, {transform_indices = @transform_1, window_bounds = array<i64: 8, 1>}, {transform_indices = @transform_2, window_bounds = array<i64: 8, 1>}]} {
    %c0 = arith.constant 0 : index
    %c0_0 = arith.constant 0 : index
    %0 = vector.load %arg1[%c0, %c0_0] : memref<8x32xf32, #tpu.memory_space<vmem>>, vector<8x32xf32>
    %c0_1 = arith.constant 0 : index
    %c0_2 = arith.constant 0 : index
    %1 = vector.load %arg2[%c0_1, %c0_2] : memref<8x1xi32, #tpu.memory_space<vmem>>, vector<8x1xi32>
    %cst = arith.constant dense<0xFF800000> : vector<8xf32>
    %2 = vector.multi_reduction <maximumf>, %0, %cst [1] : vector<8x32xf32> to vector<8xf32>
    %3 = vector.shape_cast %2 : vector<8xf32> to vector<8x1xf32>
    %4 = vector.broadcast %3 : vector<8x1xf32> to vector<8x32xf32>
    %5 = arith.subf %0, %4 : vector<8x32xf32>
    %6 = tpu.iota {dimensions = array<i32: 1>} : vector<8x32xi32>
    %7 = vector.broadcast %1 : vector<8x1xi32> to vector<8x32xi32>
    %8 = arith.cmpi eq, %6, %7 : vector<8x32xi32>
    %cst_3 = arith.constant 0.000000e+00 : f32
    %9 = vector.broadcast %cst_3 : f32 to vector<8x32xf32>
    %10 = arith.select %8, %5, %9 : vector<8x32xi1>, vector<8x32xf32>
    %cst_4 = arith.constant dense<0.000000e+00> : vector<8xf32>
    %11 = vector.multi_reduction <add>, %10, %cst_4 [1] : vector<8x32xf32> to vector<8xf32>
    %12 = vector.shape_cast %11 : vector<8xf32> to vector<8x1xf32>
    %13 = math.exp %5 : vector<8x32xf32>
    %cst_5 = arith.constant dense<0.000000e+00> : vector<8xf32>
    %14 = vector.multi_reduction <add>, %13, %cst_5 [1] : vector<8x32xf32> to vector<8xf32>
    %15 = vector.shape_cast %14 : vector<8xf32> to vector<8x1xf32>
    %16 = math.log %15 : vector<8x1xf32>
    %17 = arith.subf %16, %12 : vector<8x1xf32>
    %c0_6 = arith.constant 0 : index
    %c0_7 = arith.constant 0 : index
    %18 = vector.load %arg3[%c0_6, %c0_7] : memref<8x1xf32, #tpu.memory_space<vmem>>, vector<8x1xf32>
    tpu.vector_store %arg3[%c0_6, %c0_7], %17 {strides = array<i32>} : memref<8x1xf32, #tpu.memory_space<vmem>>, vector<8x1xf32>,
    return
  }
  func.func @transform_0(%arg0: i32) -> (i32, i32) {
    %c0_i32 = arith.constant 0 : i32
    %c0_i32_0 = arith.constant 0 : i32
    return %arg0, %c0_i32 : i32, i32
  }
  func.func @transform_1(%arg0: i32) -> (i32, i32) {
    %c0_i32 = arith.constant 0 : i32
    %c0_i32_0 = arith.constant 0 : i32
    return %arg0, %c0_i32 : i32, i32
  }
  func.func @transform_2(%arg0: i32) -> (i32, i32) {
    %c0_i32 = arith.constant 0 : i32
    %c0_i32_0 = arith.constant 0 : i32
    return %arg0, %c0_i32 : i32, i32
  }
}

</mosaic_0001>

<llo_original>
// kernel: tpu_custom_call.1
$region0: #{tpu_custom_call.1}
  #allocation0 [shape = 'u32[]', space=smem, size = 0x4, offset = 0x4, fixed_abs, tag = 'smem constant byte address 0x4 - core index']
  #allocation1 [shape = 'u32[144,128]{1,0:T(1,128)}', space=vmem, size = 0x12000, scoped, tag = 'internal scratch']
  %s0 = inlined_call_operand.vmem [shape: f32[8,32], index: 0, kind: input, shape index: {}]
  %s1 = inlined_call_operand.vmem [shape: s32[8,1], index: 1, kind: input, shape index: {}]
  %s2 = inlined_call_operand.vmem [shape: f32[8,1], index: 2, kind: output, shape index: {}]
  %s3 = sld [smem:[#allocation0]]
  $region18: #{tpu_custom_call.1} parent=0
    _
  %s5 = ssub.s32 1, %s3
  %s6 = scalar_select 0, %s5, %s3
  // Predicated region
  $region2: #{tpu_custom_call.1} parent=0 // pred_check
    _
  $region3: #{tpu_custom_call.1} parent=0 // pred_check_branch
    %8 = sbr.rel (0) target = $region5
  $region4: #{tpu_custom_call.1} parent=0 // pred_region
    _
  $region5: #{tpu_custom_call.1} parent=0 // pred_fallthru
    _
  // Predicated region
  $region6: #{tpu_custom_call.1} parent=0 // pred_check
    _
  $region7: #{tpu_custom_call.1} parent=0 // pred_check_branch
    %10 = sbr.rel (0) target = $region9
  $region8: #{tpu_custom_call.1} parent=0 // pred_region
    _
  $region9: #{tpu_custom_call.1} parent=0 // pred_fallthru
    _
  %v11 = vld [vmem:[%s0] sm:$0xff]
  %v12 = vld [vmem:[%s1] sm:$0xff]
  %vm13 = vcmask 261120
  %v14 = vsel %vm13, %v11, -inf
  %15 = vmax.xlane.f32.xlu0 %v14
  %v16 = vpop.xlane.xlu0 %15
  %v17 = vsub.f32 %v11, %v16
  %v18 = vlaneseq
  %v19 = vand.u32 %v18, 127
  %20 = vset.pattern.permute.xlu0 0
  %21 = vperm.xlu0 %20, %v12
  %v22 = vpop.permute.xlu0 %21
  %vm23 = vcmp.eq.s32.totalorder %v19, %v22
  %v24 = vsel %vm23, %v17, 0.0
  %v25 = vsel %vm13, %v24, 0.0
  %26 = vadd.xlane.f32.xlu0 %v25
  %v27 = vpop.xlane.xlu0 %26
  %v28 = vmul.f32 %v17, 1.442695
  %v29 = vpow.pop %v28
  %v30 = vsel %vm13, %v29, 0.0
  %31 = vadd.xlane.f32.xlu0 %v30
  %v32 = vpop.xlane.xlu0 %31
  %v33 = vlog2.pop %v32
  %v34 = vmul.f32 %v33, 0.6931472
  %v35 = vsub.f32 %v34, %v27
  %vm36 = vcmask 7168
  %37 = vst.msk [vmem:[%s2] sm:$0xff] %vm36, %v35
  // Predicated region
  $region10: #{tpu_custom_call.1} parent=0 // pred_check
    _
  $region11: #{tpu_custom_call.1} parent=0 // pred_check_branch
    %39 = sbr.rel (0) target = $region13
  $region12: #{tpu_custom_call.1} parent=0 // pred_region
    _
  $region13: #{tpu_custom_call.1} parent=0 // pred_fallthru
    _
  // Predicated region
  $region14: #{tpu_custom_call.1} parent=0 // pred_check
    _
  $region15: #{tpu_custom_call.1} parent=0 // pred_check_branch
    %41 = sbr.rel (0) target = $region17
  $region16: #{tpu_custom_call.1} parent=0 // pred_region
    _
  $region17: #{tpu_custom_call.1} parent=0 // pred_fallthru
    _

</llo_original>
